<compile_context>
chip_gen: v5e
topology: v5e:2x2
jax: 0.10.0
libtpu: 0.0.40
codegen_flags: <defaults>
</compile_context>

<pallas_src>
import functools

import jax
import jax.numpy as jnp
from jax.experimental import pallas as pl
from jax.experimental.pallas import tpu as pltpu


def _round_up(v, m):
    return ((v + m - 1) // m) * m


# ----------------------------------------------------------------------------
# q_shift (pure data movement, channel-last -> plain JAX glue, no transposes)
# ----------------------------------------------------------------------------
def q_shift(x, shift_pixel, gamma, patch_resolution):
    """Vision-RWKV quarter-channel spatial shift, channel-last.

    x: (B, N, C) with N = H*W. Returns (B, N, C)."""
    B, N, C = x.shape
    H, W = patch_resolution
    s = shift_pixel
    g = int(C * gamma)
    if s <= 0 or g == 0:
        return x

    xhw = x.reshape(B, H, W, C)

    def shift_right_w(t):   # out[..., w, :] = in[..., w - s, :]
        return jnp.pad(t[:, :, :W - s, :], ((0, 0), (0, 0), (s, 0), (0, 0)))

    def shift_left_w(t):    # out[..., w, :] = in[..., w + s, :]
        return jnp.pad(t[:, :, s:, :], ((0, 0), (0, 0), (0, s), (0, 0)))

    def shift_down_h(t):    # out[:, h, ...] = in[:, h - s, ...]
        return jnp.pad(t[:, :H - s, :, :], ((0, 0), (s, 0), (0, 0), (0, 0)))

    def shift_up_h(t):      # out[:, h, ...] = in[:, h + s, ...]
        return jnp.pad(t[:, s:, :, :], ((0, 0), (0, s), (0, 0), (0, 0)))

    parts = [
        shift_right_w(xhw[..., 0:g]),
        shift_left_w(xhw[..., g:2 * g]),
        shift_down_h(xhw[..., 2 * g:3 * g]),
        shift_up_h(xhw[..., 3 * g:4 * g]),
    ]
    if 4 * g < C:
        parts.append(xhw[..., 4 * g:])
    out = jnp.concatenate(parts, axis=-1)
    return out.reshape(B, N, C)


# ----------------------------------------------------------------------------
# Pallas kernel: the channel-mix hot path
#   d  = x - xx;  xk = xx + d*mk;  xr = xx + d*mr
#   k  = relu(xk @ Wk)^2 ; kv = k @ Wv ; out = sigmoid(xr @ Wr) * kv
# ----------------------------------------------------------------------------
def channel_mix_kernel(x_ref, xx_ref, mk_ref, mr_ref, wk_ref, wr_ref, wv_ref,
                       o_ref):
    x = x_ref[...].astype(jnp.float32)      # (tm, Cp)
    xx = xx_ref[...].astype(jnp.float32)    # (tm, Cp)
    mk = mk_ref[...].astype(jnp.float32)    # (1, Cp)  broadcasts over rows
    mr = mr_ref[...].astype(jnp.float32)    # (1, Cp)

    # One FMA per branch on the VPU.
    d = x - xx
    xk = xx + d * mk
    xr = xx + d * mr

    # bf16 MXU matmuls, f32 accumulation.
    k = jnp.dot(xk.astype(jnp.bfloat16), wk_ref[...],
                preferred_element_type=jnp.float32)          # (tm, Hp)
    k = jnp.square(jnp.maximum(k, 0.0))                      # relu(k)^2
    # TODO(synk): key_norm (LayerNorm on k) not implemented; module default is
    # key_norm=False so the reference forward never runs it.

    kv = jnp.dot(k.astype(jnp.bfloat16), wv_ref[...],
                 preferred_element_type=jnp.float32)         # (tm, Cp)

    r = jax.nn.sigmoid(jnp.dot(xr.astype(jnp.bfloat16), wr_ref[...],
                               preferred_element_type=jnp.float32))  # (tm, Cp)

    o_ref[...] = (r * kv).astype(o_ref.dtype)


def channel_mix_pallas(x, xx, mix_k, mix_r, wk_t, wr_t, wv_t, *, tile_m=256):
    """x, xx: (B, N, C); mix_*: (C,); w*_t: (in, out). Returns (B, N, C)."""
    B, N, C = x.shape
    hidden = wk_t.shape[1]
    M = B * N

    # Lane-dense padding (last dims multiples of 128) + row padding to tile_m.
    Cp = _round_up(C, 128)
    Hp = _round_up(hidden, 128)
    tile_m = max(8, min(tile_m, _round_up(M, 8)))   # multiple of 8 by const.
    Mp = _round_up(M, tile_m)

    pad_m = Mp - M
    pad_c = Cp - C
    pad_h = Hp - hidden

    x2d = jnp.pad(x.reshape(M, C), ((0, pad_m), (0, pad_c)))
    xx2d = jnp.pad(xx.reshape(M, C), ((0, pad_m), (0, pad_c)))
    mk2d = jnp.pad(mix_k.reshape(1, C), ((0, 0), (0, pad_c)))
    mr2d = jnp.pad(mix_r.reshape(1, C), ((0, 0), (0, pad_c)))

    # Weights cast to bf16 (MXU inputs) and zero-padded so the extra
    # rows/cols are exact no-ops.  Grid-invariant -> DMA'd into VMEM once.
    wk_p = jnp.pad(wk_t, ((0, pad_c), (0, pad_h))).astype(jnp.bfloat16)
    wr_p = jnp.pad(wr_t, ((0, pad_c), (0, pad_c))).astype(jnp.bfloat16)
    wv_p = jnp.pad(wv_t, ((0, pad_h), (0, pad_c))).astype(jnp.bfloat16)

    grid = (Mp // tile_m,)

    # Explicit VMEM budget: bf16 weights + double-buffered activation/output
    # tiles + the (tile_m, Hp) f32 intermediate + slack.  Clamped to 96 MiB;
    # v7x (64 MiB/TC) configs should keep C/hidden modest or tile hidden.
    itm = jnp.dtype(x.dtype).itemsize
    weight_bytes = 2 * (Cp * Hp + Cp * Cp + Hp * Cp)            # bf16, 1 copy
    act_bytes = 2 * tile_m * (2 * Cp * itm + Cp * itm)          # dbl-buffered
    interm_bytes = tile_m * Hp * 4
    vmem_bytes = int(min(max(weight_bytes + act_bytes + interm_bytes
                             + (8 << 20), 32 << 20), 96 << 20))

    flops = 2 * Mp * Cp * (2 * Hp + Cp)      # three matmuls
    bytes_accessed = (3 * Mp * Cp * itm      # x, xx in; out
                      + 2 * (Cp * Hp + Cp * Cp + Hp * Cp))

    out2d = pl.pallas_call(
        channel_mix_kernel,
        out_shape=jax.ShapeDtypeStruct((Mp, Cp), x.dtype),
        grid_spec=pltpu.PrefetchScalarGridSpec(
            num_scalar_prefetch=0,
            grid=grid,
            in_specs=[
                pl.BlockSpec((tile_m, Cp), lambda i: (i, 0)),   # x rows
                pl.BlockSpec((tile_m, Cp), lambda i: (i, 0)),   # xx rows
                pl.BlockSpec((1, Cp), lambda i: (0, 0)),        # mix_k
                pl.BlockSpec((1, Cp), lambda i: (0, 0)),        # mix_r
                pl.BlockSpec((Cp, Hp), lambda i: (0, 0)),       # Wk^T (bf16)
                pl.BlockSpec((Cp, Cp), lambda i: (0, 0)),       # Wr^T (bf16)
                pl.BlockSpec((Hp, Cp), lambda i: (0, 0)),       # Wv^T (bf16)
            ],
            out_specs=pl.BlockSpec((tile_m, Cp), lambda i: (i, 0)),
        ),
        compiler_params=pltpu.CompilerParams(
            dimension_semantics=("parallel",),
            vmem_limit_bytes=vmem_bytes),
        cost_estimate=pl.CostEstimate(
            flops=flops, transcendentals=Mp * Cp,
            bytes_accessed=bytes_accessed),
    )(x2d, xx2d, mk2d, mr2d, wk_p, wr_p, wv_p)

    return out2d[:M, :C].reshape(B, N, C)


# ----------------------------------------------------------------------------
# Module-level wrapper (parameter setup + shift glue + kernel call)
# ----------------------------------------------------------------------------
def vrwkv_channel_mix_forward(x, patch_resolution, params, *,
                              shift_pixel=1, channel_gamma=1.0 / 4):
    if shift_pixel > 0:
        xx = q_shift(x, shift_pixel, channel_gamma, patch_resolution)
    else:
        xx = x
    return channel_mix_pallas(x, xx,
                              params["spatial_mix_k"], params["spatial_mix_r"],
                              params["wk_t"], params["wr_t"], params["wv_t"])


def init_params(key, n_embd, n_layer, layer_id, hidden_rate=4,
                dtype=jnp.float32):
    hidden = hidden_rate * n_embd
    # 'fancy' init: spatial_mix = (i / n_embd) ** (1 - layer_id / n_layer)
    ratio_1_to_almost0 = 1.0 - layer_id / n_layer
    base = jnp.arange(n_embd, dtype=jnp.float32) / n_embd
    spatial_mix = jnp.power(base, ratio_1_to_almost0).astype(dtype)

    k1, k2, k3 = jax.random.split(key, 3)
    # Deterministic synthetic linear weights; stored transposed (in, out).
    wk_t = jax.random.normal(k1, (n_embd, hidden), dtype) * 0.02
    wr_t = jax.random.normal(k2, (n_embd, n_embd), dtype) * 0.02
    wv_t = jax.random.normal(k3, (hidden, n_embd), dtype) * 0.02

    return dict(spatial_mix_k=spatial_mix, spatial_mix_r=spatial_mix,
                wk_t=wk_t, wr_t=wr_t, wv_t=wv_t)


# ----------------------------------------------------------------------------
# Pure-JAX f32 reference for correctness check
# ----------------------------------------------------------------------------
def reference_forward(x, patch_resolution, params, *,
                      shift_pixel=1, channel_gamma=1.0 / 4):
    xx = q_shift(x, shift_pixel, channel_gamma, patch_resolution)
    mk = params["spatial_mix_k"][None, None, :]
    mr = params["spatial_mix_r"][None, None, :]
    xk = x * mk + xx * (1 - mk)
    xr = x * mr + xx * (1 - mr)
    k = jnp.square(jnp.maximum(xk @ params["wk_t"], 0.0))
    kv = k @ params["wv_t"]
    return jax.nn.sigmoid(xr @ params["wr_t"]) * kv


if __name__ == "__main__":
    # Small, module-consistent shapes. n_embd=96 is deliberately NOT a lane
    # multiple so the channel-padding path is exercised.
    B = 2
    Hpatch, Wpatch = 8, 8     # patch_resolution
    N = Hpatch * Wpatch       # sequence length
    n_embd = 96
    n_layer = 4
    layer_id = 1
    hidden_rate = 4

    key = jax.random.PRNGKey(0)
    kx, kp = jax.random.split(key)
    x = jax.random.normal(kx, (B, N, n_embd), jnp.float32)
    params = init_params(kp, n_embd, n_layer, layer_id, hidden_rate)

    fwd = jax.jit(vrwkv_channel_mix_forward, static_argnums=(1,),
                  static_argnames=("shift_pixel", "channel_gamma"))
    out = fwd(x, (Hpatch, Wpatch), params)
    out = jax.block_until_ready(out)

    ref = reference_forward(x, (Hpatch, Wpatch), params)
    assert out.shape == (B, N, n_embd)
    # bf16 MXU matmuls (f32 accumulation) vs f32 reference -> loosened tol.
    err = float(jnp.max(jnp.abs(out - ref)))
    assert jnp.allclose(out, ref, atol=1e-2, rtol=1e-2), err

    print("KERNEL_OK")
</pallas_src>

<mosaic_0001>
module attributes {stable_mosaic.version = 11 : i64} {
  func.func @channel_mix_kernel(%arg0: i32, %arg1: memref<128x128xf32, #tpu.memory_space<vmem>>, %arg2: memref<128x128xf32, #tpu.memory_space<vmem>>, %arg3: memref<1x128xf32, #tpu.memory_space<vmem>>, %arg4: memref<1x128xf32, #tpu.memory_space<vmem>>, %arg5: memref<128x384xbf16, #tpu.memory_space<vmem>>, %arg6: memref<128x128xbf16, #tpu.memory_space<vmem>>, %arg7: memref<384x128xbf16, #tpu.memory_space<vmem>>, %arg8: memref<128x128xf32, #tpu.memory_space<vmem>>) attributes {dimension_semantics = [#tpu.dimension_semantics<parallel>], iteration_bounds = array<i64: 1>, scalar_prefetch = 0 : i64, scratch_operands = 0 : i64, tpu.core_type = #tpu.core_type<tc>, window_params = [{transform_indices = @transform_0, window_bounds = array<i64: 128, 128>}, {transform_indices = @transform_1, window_bounds = array<i64: 128, 128>}, {pipeline_mode = #tpu.pipeline_mode<synchronous>, transform_indices = @transform_2, window_bounds = array<i64: 1, 128>}, {pipeline_mode = #tpu.pipeline_mode<synchronous>, transform_indices = @transform_3, window_bounds = array<i64: 1, 128>}, {pipeline_mode = #tpu.pipeline_mode<synchronous>, transform_indices = @transform_4, window_bounds = array<i64: 128, 384>}, {pipeline_mode = #tpu.pipeline_mode<synchronous>, transform_indices = @transform_5, window_bounds = array<i64: 128, 128>}, {pipeline_mode = #tpu.pipeline_mode<synchronous>, transform_indices = @transform_6, window_bounds = array<i64: 384, 128>}, {transform_indices = @transform_7, window_bounds = array<i64: 128, 128>}]} {
    %c0 = arith.constant 0 : index
    %c0_0 = arith.constant 0 : index
    %0 = vector.load %arg1[%c0, %c0_0] : memref<128x128xf32, #tpu.memory_space<vmem>>, vector<128x128xf32>
    %c0_1 = arith.constant 0 : index
    %c0_2 = arith.constant 0 : index
    %1 = vector.load %arg2[%c0_1, %c0_2] : memref<128x128xf32, #tpu.memory_space<vmem>>, vector<128x128xf32>
    %c0_3 = arith.constant 0 : index
    %c0_4 = arith.constant 0 : index
    %2 = vector.load %arg3[%c0_3, %c0_4] : memref<1x128xf32, #tpu.memory_space<vmem>>, vector<1x128xf32>
    %c0_5 = arith.constant 0 : index
    %c0_6 = arith.constant 0 : index
    %3 = vector.load %arg4[%c0_5, %c0_6] : memref<1x128xf32, #tpu.memory_space<vmem>>, vector<1x128xf32>
    %4 = arith.subf %0, %1 : vector<128x128xf32>
    %5 = vector.broadcast %2 : vector<1x128xf32> to vector<128x128xf32>
    %6 = arith.mulf %4, %5 : vector<128x128xf32>
    %7 = arith.addf %1, %6 : vector<128x128xf32>
    %8 = vector.broadcast %3 : vector<1x128xf32> to vector<128x128xf32>
    %9 = arith.mulf %4, %8 : vector<128x128xf32>
    %10 = arith.addf %1, %9 : vector<128x128xf32>
    %11 = arith.truncf %7 : vector<128x128xf32> to vector<128x128xbf16>
    %c0_7 = arith.constant 0 : index
    %c0_8 = arith.constant 0 : index
    %12 = vector.load %arg5[%c0_7, %c0_8] : memref<128x384xbf16, #tpu.memory_space<vmem>>, vector<128x384xbf16>
    %cst = arith.constant dense<0.000000e+00> : vector<128x384xf32>
    %13 = tpu.matmul %11, %12, %cst {dimension_numbers = #tpu.dot_dimension_numbers<[1], [0], [0], [1], [0, 0, 1, 1], [], []>} : vector<128x128xbf16>, vector<128x384xbf16>, vector<128x384xf32> -> vector<128x384xf32>
    %cst_9 = arith.constant 0.000000e+00 : f32
    %14 = vector.broadcast %cst_9 : f32 to vector<128x384xf32>
    %15 = arith.maximumf %13, %14 : vector<128x384xf32>
    %16 = arith.mulf %15, %15 : vector<128x384xf32>
    %17 = arith.truncf %16 : vector<128x384xf32> to vector<128x384xbf16>
    %c0_10 = arith.constant 0 : index
    %c0_11 = arith.constant 0 : index
    %18 = vector.load %arg7[%c0_10, %c0_11] : memref<384x128xbf16, #tpu.memory_space<vmem>>, vector<384x128xbf16>
    %cst_12 = arith.constant dense<0.000000e+00> : vector<128x128xf32>
    %19 = tpu.matmul %17, %18, %cst_12 {dimension_numbers = #tpu.dot_dimension_numbers<[1], [0], [0], [1], [0, 0, 1, 1], [], []>} : vector<128x384xbf16>, vector<384x128xbf16>, vector<128x128xf32> -> vector<128x128xf32>
    %20 = arith.truncf %10 : vector<128x128xf32> to vector<128x128xbf16>
    %c0_13 = arith.constant 0 : index
    %c0_14 = arith.constant 0 : index
    %21 = vector.load %arg6[%c0_13, %c0_14] : memref<128x128xbf16, #tpu.memory_space<vmem>>, vector<128x128xbf16>
    %cst_15 = arith.constant dense<0.000000e+00> : vector<128x128xf32>
    %22 = tpu.matmul %20, %21, %cst_15 {dimension_numbers = #tpu.dot_dimension_numbers<[1], [0], [0], [1], [0, 0, 1, 1], [], []>} : vector<128x128xbf16>, vector<128x128xbf16>, vector<128x128xf32> -> vector<128x128xf32>
    %23 = arith.negf %22 : vector<128x128xf32>
    %24 = math.exp %23 : vector<128x128xf32>
    %cst_16 = arith.constant 1.000000e+00 : f32
    %25 = vector.broadcast %cst_16 : f32 to vector<128x128xf32>
    %26 = arith.addf %25, %24 : vector<128x128xf32>
    %27 = arith.divf %25, %26 : vector<128x128xf32>
    %28 = arith.mulf %27, %19 : vector<128x128xf32>
    %c0_17 = arith.constant 0 : index
    %c0_18 = arith.constant 0 : index
    %29 = vector.load %arg8[%c0_17, %c0_18] : memref<128x128xf32, #tpu.memory_space<vmem>>, vector<128x128xf32>
    tpu.vector_store %arg8[%c0_17, %c0_18], %28 {strides = array<i32>} : memref<128x128xf32, #tpu.memory_space<vmem>>, vector<128x128xf32>,
    return
  }
  func.func @transform_0(%arg0: i32) -> (i32, i32) {
    %c0_i32 = arith.constant 0 : i32
    %c0_i32_0 = arith.constant 0 : i32
    return %arg0, %c0_i32 : i32, i32
  }
  func.func @transform_1(%arg0: i32) -> (i32, i32) {
    %c0_i32 = arith.constant 0 : i32
    %c0_i32_0 = arith.constant 0 : i32
    return %arg0, %c0_i32 : i32, i32
  }
  func.func @transform_2(%arg0: i32) -> (i32, i32) {
    %c0_i32 = arith.constant 0 : i32
    %c0_i32_0 = arith.constant 0 : i32
    %c0_i32_1 = arith.constant 0 : i32
    return %c0_i32, %c0_i32_0 : i32, i32
  }
  func.func @transform_3(%arg0: i32) -> (i32, i32) {
    %c0_i32 = arith.constant 0 : i32
    %c0_i32_0 = arith.constant 0 : i32
    %c0_i32_1 = arith.constant 0 : i32
    return %c0_i32, %c0_i32_0 : i32, i32
  }
  func.func @transform_4(%arg0: i32) -> (i32, i32) {
    %c0_i32 = arith.constant 0 : i32
    %c0_i32_0 = arith.constant 0 : i32
    %c0_i32_1 = arith.constant 0 : i32
    return %c0_i32, %c0_i32_0 : i32, i32
  }
  func.func @transform_5(%arg0: i32) -> (i32, i32) {
    %c0_i32 = arith.constant 0 : i32
    %c0_i32_0 = arith.constant 0 : i32
    %c0_i32_1 = arith.constant 0 : i32
    return %c0_i32, %c0_i32_0 : i32, i32
  }
  func.func @transform_6(%arg0: i32) -> (i32, i32) {
    %c0_i32 = arith.constant 0 : i32
    %c0_i32_0 = arith.constant 0 : i32
    %c0_i32_1 = arith.constant 0 : i32
    return %c0_i32, %c0_i32_0 : i32, i32
  }
  func.func @transform_7(%arg0: i32) -> (i32, i32) {
    %c0_i32 = arith.constant 0 : i32
    %c0_i32_0 = arith.constant 0 : i32
    return %arg0, %c0_i32 : i32, i32
  }
}

</mosaic_0001>

<llo_original>
// kernel: vrwkv_channel_mix_forward.1
$region0: #{vrwkv_channel_mix_forward.1}
  #allocation0 [shape = 'u32[]', space=smem, size = 0x4, offset = 0x4, fixed_abs, tag = 'smem constant byte address 0x4 - core index']
  #allocation1 [shape = 'u32[72,128]{1,0:T(1,128)}', space=vmem, size = 0x9000, scoped, tag = 'internal scratch']
  %s0 = inlined_call_operand.vmem [shape: f32[128,128], index: 0, kind: input, shape index: {}]
  %s1 = inlined_call_operand.vmem [shape: f32[128,128], index: 1, kind: input, shape index: {}]
  %s2 = inlined_call_operand.vmem [shape: f32[1,128], index: 2, kind: input, shape index: {}]
  %s3 = inlined_call_operand.vmem [shape: f32[1,128], index: 3, kind: input, shape index: {}]
  %s4 = inlined_call_operand.vmem [shape: bf16[128,384], index: 4, kind: input, shape index: {}]
  %s5 = inlined_call_operand.vmem [shape: bf16[128,128], index: 5, kind: input, shape index: {}]
  %s6 = inlined_call_operand.vmem [shape: bf16[384,128], index: 6, kind: input, shape index: {}]
  %s7 = inlined_call_operand.hbm [shape: f32[128,128], index: 7, kind: output, shape index: {}]
  %s8 = sld [smem:[#allocation0]]
  $region38: #{vrwkv_channel_mix_forward.1} parent=0
    _
  %s10 = ssub.s32 1, %s8
  %s11 = scalar_select 0, %s10, %s8
  $region1: #{vrwkv_channel_mix_forward.1} parent=0
    #allocation2 [shape = 'u8[65536]{0}', space=vmem, size = 0x10000, scoped, tag = 'output window, operand 0, single buffered']
    #allocation3 [shape = 's32[1]{0}', space=sflag, size = 0x4, scoped, tag = 'scoped memory for vrwkv_channel_mix_forward.1']
    %12 = vsyncpa [#allocation3], 0
    // Predicated region
    $region2: #{vrwkv_channel_mix_forward.1} parent=1 // pred_check
      _
    $region3: #{vrwkv_channel_mix_forward.1} parent=1 // pred_check_branch
      %14 = sbr.rel (0) target = $region5
    $region4: #{vrwkv_channel_mix_forward.1} parent=1 // pred_region
      _
    $region5: #{vrwkv_channel_mix_forward.1} parent=1 // pred_fallthru
      _
    // Predicated region
    $region6: #{vrwkv_channel_mix_forward.1} parent=1 // pred_check
      _
    $region7: #{vrwkv_channel_mix_forward.1} parent=1 // pred_check_branch
      %16 = sbr.rel (0) target = $region9
    $region8: #{vrwkv_channel_mix_forward.1} parent=1 // pred_region
      _
    $region9: #{vrwkv_channel_mix_forward.1} parent=1 // pred_fallthru
      _
    // Predicated region
    $region10: #{vrwkv_channel_mix_forward.1} parent=1 // pred_check
      _
    $region11: #{vrwkv_channel_mix_forward.1} parent=1 // pred_check_branch
      %18 = sbr.rel (0) target = $region13
    $region12: #{vrwkv_channel_mix_forward.1} parent=1 // pred_region
      _
    $region13: #{vrwkv_channel_mix_forward.1} parent=1 // pred_fallthru
      _
    // Predicated region
    $region14: #{vrwkv_channel_mix_forward.1} parent=1 // pred_check
      _
    $region15: #{vrwkv_channel_mix_forward.1} parent=1 // pred_check_branch
      %20 = sbr.rel (0) target = $region17
    $region16: #{vrwkv_channel_mix_forward.1} parent=1 // pred_region
      _
    $region17: #{vrwkv_channel_mix_forward.1} parent=1 // pred_fallthru
      _
    // Predicated region
    $region18: #{vrwkv_channel_mix_forward.1} parent=1 // pred_check
      _
    $region19: #{vrwkv_channel_mix_forward.1} parent=1 // pred_check_branch
      %22 = sbr.rel (0) target = $region21
    $region20: #{vrwkv_channel_mix_forward.1} parent=1 // pred_region
      _
    $region21: #{vrwkv_channel_mix_forward.1} parent=1 // pred_fallthru
      _
    // Predicated region
    $region22: #{vrwkv_channel_mix_forward.1} parent=1 // pred_check
      _
    $region23: #{vrwkv_channel_mix_forward.1} parent=1 // pred_check_branch
      %24 = sbr.rel (0) target = $region25
    $region24: #{vrwkv_channel_mix_forward.1} parent=1 // pred_region
      _
    $region25: #{vrwkv_channel_mix_forward.1} parent=1 // pred_fallthru
      _
    // Predicated region
    $region26: #{vrwkv_channel_mix_forward.1} parent=1 // pred_check
      _
    $region27: #{vrwkv_channel_mix_forward.1} parent=1 // pred_check_branch
      %26 = sbr.rel (0) target = $region29
    $region28: #{vrwkv_channel_mix_forward.1} parent=1 // pred_region
      _
    $region29: #{vrwkv_channel_mix_forward.1} parent=1 // pred_fallthru
      _
    %v27 = vld [vmem:[%s0] sm:$0xff]
    %v28 = vld [vmem:[%s0 + $0x8] sm:$0xff]
    %v29 = vld [vmem:[%s0 + $0x10] sm:$0xff]
    %v30 = vld [vmem:[%s0 + $0x18] sm:$0xff]
    %v31 = vld [vmem:[%s0 + $0x20] sm:$0xff]
    %v32 = vld [vmem:[%s0 + $0x28] sm:$0xff]
    %v33 = vld [vmem:[%s0 + $0x30] sm:$0xff]
    %v34 = vld [vmem:[%s0 + $0x38] sm:$0xff]
    %v35 = vld [vmem:[%s0 + $0x40] sm:$0xff]
    %v36 = vld [vmem:[%s0 + $0x48] sm:$0xff]
    %v37 = vld [vmem:[%s0 + $0x50] sm:$0xff]
    %v38 = vld [vmem:[%s0 + $0x58] sm:$0xff]
    %v39 = vld [vmem:[%s0 + $0x60] sm:$0xff]
    %v40 = vld [vmem:[%s0 + $0x68] sm:$0xff]
    %v41 = vld [vmem:[%s0 + $0x70] sm:$0xff]
    %v42 = vld [vmem:[%s0 + $0x78] sm:$0xff]
    %v43 = vld [vmem:[%s1] sm:$0xff]
    %v44 = vld [vmem:[%s1 + $0x8] sm:$0xff]
    %v45 = vld [vmem:[%s1 + $0x10] sm:$0xff]
    %v46 = vld [vmem:[%s1 + $0x18] sm:$0xff]
    %v47 = vld [vmem:[%s1 + $0x20] sm:$0xff]
    %v48 = vld [vmem:[%s1 + $0x28] sm:$0xff]
    %v49 = vld [vmem:[%s1 + $0x30] sm:$0xff]
    %v50 = vld [vmem:[%s1 + $0x38] sm:$0xff]
    %v51 = vld [vmem:[%s1 + $0x40] sm:$0xff]
    %v52 = vld [vmem:[%s1 + $0x48] sm:$0xff]
    %v53 = vld [vmem:[%s1 + $0x50] sm:$0xff]
    %v54 = vld [vmem:[%s1 + $0x58] sm:$0xff]
    %v55 = vld [vmem:[%s1 + $0x60] sm:$0xff]
    %v56 = vld [vmem:[%s1 + $0x68] sm:$0xff]
    %v57 = vld [vmem:[%s1 + $0x70] sm:$0xff]
    %v58 = vld [vmem:[%s1 + $0x78] sm:$0xff]
    %v59 = vld [vmem:[%s2] sm:$0x1]
    %v60 = vld [vmem:[%s3] sm:$0x1]
    %v61 = vsub.f32 %v27, %v43
    %v62 = vsub.f32 %v28, %v44
    %v63 = vsub.f32 %v29, %v45
    %v64 = vsub.f32 %v30, %v46
    %v65 = vsub.f32 %v31, %v47
    %v66 = vsub.f32 %v32, %v48
    %v67 = vsub.f32 %v33, %v49
    %v68 = vsub.f32 %v34, %v50
    %v69 = vsub.f32 %v35, %v51
    %v70 = vsub.f32 %v36, %v52
    %v71 = vsub.f32 %v37, %v53
    %v72 = vsub.f32 %v38, %v54
    %v73 = vsub.f32 %v39, %v55
    %v74 = vsub.f32 %v40, %v56
    %v75 = vsub.f32 %v41, %v57
    %v76 = vsub.f32 %v42, %v58
    %v78 = vperm.slane %v59, 0
    %v80 = vmul.f32 %v61, %v78
    %v81 = vmul.f32 %v62, %v78
    %v82 = vmul.f32 %v63, %v78
    %v83 = vmul.f32 %v64, %v78
    %v84 = vmul.f32 %v65, %v78
    %v85 = vmul.f32 %v66, %v78
    %v86 = vmul.f32 %v67, %v78
    %v87 = vmul.f32 %v68, %v78
    %v88 = vmul.f32 %v69, %v78
    %v89 = vmul.f32 %v70, %v78
    %v90 = vmul.f32 %v71, %v78
    %v91 = vmul.f32 %v72, %v78
    %v92 = vmul.f32 %v73, %v78
    %v93 = vmul.f32 %v74, %v78
    %v94 = vmul.f32 %v75, %v78
    %v95 = vmul.f32 %v76, %v78
    %v96 = vadd.f32 %v43, %v80
    %v97 = vadd.f32 %v44, %v81
    %v98 = vadd.f32 %v45, %v82
    %v99 = vadd.f32 %v46, %v83
    %v100 = vadd.f32 %v47, %v84
    %v101 = vadd.f32 %v48, %v85
    %v102 = vadd.f32 %v49, %v86
    %v103 = vadd.f32 %v50, %v87
    %v104 = vadd.f32 %v51, %v88
    %v105 = vadd.f32 %v52, %v89
    %v106 = vadd.f32 %v53, %v90
    %v107 = vadd.f32 %v54, %v91
    %v108 = vadd.f32 %v55, %v92
    %v109 = vadd.f32 %v56, %v93
    %v110 = vadd.f32 %v57, %v94
    %v111 = vadd.f32 %v58, %v95
    %v113 = vperm.slane %v60, 0
    %v115 = vmul.f32 %v61, %v113
    %v116 = vmul.f32 %v62, %v113
    %v117 = vmul.f32 %v63, %v113
    %v118 = vmul.f32 %v64, %v113
    %v119 = vmul.f32 %v65, %v113
    %v120 = vmul.f32 %v66, %v113
    %v121 = vmul.f32 %v67, %v113
    %v122 = vmul.f32 %v68, %v113
    %v123 = vmul.f32 %v69, %v113
    %v124 = vmul.f32 %v70, %v113
    %v125 = vmul.f32 %v71, %v113
    %v126 = vmul.f32 %v72, %v113
    %v127 = vmul.f32 %v73, %v113
    %v128 = vmul.f32 %v74, %v113
    %v129 = vmul.f32 %v75, %v113
    %v130 = vmul.f32 %v76, %v113
    %v131 = vadd.f32 %v43, %v115
    %v132 = vadd.f32 %v44, %v116
    %v133 = vadd.f32 %v45, %v117
    %v134 = vadd.f32 %v46, %v118
    %v135 = vadd.f32 %v47, %v119
    %v136 = vadd.f32 %v48, %v120
    %v137 = vadd.f32 %v49, %v121
    %v138 = vadd.f32 %v50, %v122
    %v139 = vadd.f32 %v51, %v123
    %v140 = vadd.f32 %v52, %v124
    %v141 = vadd.f32 %v53, %v125
    %v142 = vadd.f32 %v54, %v126
    %v143 = vadd.f32 %v55, %v127
    %v144 = vadd.f32 %v56, %v128
    %v145 = vadd.f32 %v57, %v129
    %v146 = vadd.f32 %v58, %v130
    %v147 = vpack.c.bf16 %v97, %v96
    %v148 = vpack.c.bf16 %v99, %v98
    %v149 = vpack.c.bf16 %v101, %v100
    %v150 = vpack.c.bf16 %v103, %v102
    %v151 = vpack.c.bf16 %v105, %v104
    %v152 = vpack.c.bf16 %v107, %v106
    %v153 = vpack.c.bf16 %v109, %v108
    %v154 = vpack.c.bf16 %v111, %v110
    %v155 = vld [vmem:[%s4] sm:$0xff]
    %v156 = vld [vmem:[%s4 + $0x8] sm:$0xf]
    %v157 = vld [vmem:[%s4 + $0xc] sm:$0xff]
    %v158 = vld [vmem:[%s4 + $0x14] sm:$0xf]
    %v159 = vld [vmem:[%s4 + $0x18] sm:$0xff]
    %v160 = vld [vmem:[%s4 + $0x20] sm:$0xf]
    %v161 = vld [vmem:[%s4 + $0x24] sm:$0xff]
    %v162 = vld [vmem:[%s4 + $0x2c] sm:$0xf]
    %v163 = vld [vmem:[%s4 + $0x30] sm:$0xff]
    %v164 = vld [vmem:[%s4 + $0x38] sm:$0xf]
    %v165 = vld [vmem:[%s4 + $0x3c] sm:$0xff]
    %v166 = vld [vmem:[%s4 + $0x44] sm:$0xf]
    %v167 = vld [vmem:[%s4 + $0x48] sm:$0xff]
    %v168 = vld [vmem:[%s4 + $0x50] sm:$0xf]
    %v169 = vld [vmem:[%s4 + $0x54] sm:$0xff]
    %v170 = vld [vmem:[%s4 + $0x5c] sm:$0xf]
    %v171 = vld [vmem:[%s4 + $0x60] sm:$0xff]
    %v172 = vld [vmem:[%s4 + $0x68] sm:$0xf]
    %v173 = vld [vmem:[%s4 + $0x6c] sm:$0xff]
    %v174 = vld [vmem:[%s4 + $0x74] sm:$0xf]
    %v175 = vld [vmem:[%s4 + $0x78] sm:$0xff]
    %v176 = vld [vmem:[%s4 + $0x80] sm:$0xf]
    %v177 = vld [vmem:[%s4 + $0x84] sm:$0xff]
    %v178 = vld [vmem:[%s4 + $0x8c] sm:$0xf]
    %v179 = vld [vmem:[%s4 + $0x90] sm:$0xff]
    %v180 = vld [vmem:[%s4 + $0x98] sm:$0xf]
    %v181 = vld [vmem:[%s4 + $0x9c] sm:$0xff]
    %v182 = vld [vmem:[%s4 + $0xa4] sm:$0xf]
    %v183 = vld [vmem:[%s4 + $0xa8] sm:$0xff]
    %v184 = vld [vmem:[%s4 + $0xb0] sm:$0xf]
    %v185 = vld [vmem:[%s4 + $0xb4] sm:$0xff]
    %v186 = vld [vmem:[%s4 + $0xbc] sm:$0xf]
    %v219 = vunpack.c.l.b16 %v155
    %v220 = vunpack.c.h.b16 %v155
    %v221 = vunpack.c.l.b16 %v156
    %v222 = vunpack.c.l.b16 %v157
    %v223 = vunpack.c.h.b16 %v157
    %v224 = vunpack.c.l.b16 %v158
    %v225 = vunpack.c.l.b16 %v159
    %v226 = vunpack.c.h.b16 %v159
    %v227 = vunpack.c.l.b16 %v160
    %v228 = vunpack.c.l.b16 %v161
    %v229 = vunpack.c.h.b16 %v161
    %v230 = vunpack.c.l.b16 %v162
    %v231 = vunpack.c.l.b16 %v163
    %v232 = vunpack.c.h.b16 %v163
    %v233 = vunpack.c.l.b16 %v164
    %v234 = vunpack.c.l.b16 %v165
    %v235 = vunpack.c.h.b16 %v165
    %v236 = vunpack.c.l.b16 %v166
    %v237 = vunpack.c.l.b16 %v167
    %v238 = vunpack.c.h.b16 %v167
    %v239 = vunpack.c.l.b16 %v168
    %v240 = vunpack.c.l.b16 %v169
    %v241 = vunpack.c.h.b16 %v169
    %v242 = vunpack.c.l.b16 %v170
    %v243 = vunpack.c.l.b16 %v171
    %v244 = vunpack.c.h.b16 %v171
    %v245 = vunpack.c.l.b16 %v172
    %v246 = vunpack.c.l.b16 %v173
    %v247 = vunpack.c.h.b16 %v173
    %v248 = vunpack.c.l.b16 %v174
    %v249 = vunpack.c.l.b16 %v175
    %v250 = vunpack.c.h.b16 %v175
    %v251 = vunpack.c.l.b16 %v176
    %v252 = vunpack.c.l.b16 %v177
    %v253 = vunpack.c.h.b16 %v177
    %v254 = vunpack.c.l.b16 %v178
    %v255 = vunpack.c.l.b16 %v179
    %v256 = vunpack.c.h.b16 %v179
    %v257 = vunpack.c.l.b16 %v180
    %v258 = vunpack.c.l.b16 %v181
    %v259 = vunpack.c.h.b16 %v181
    %v260 = vunpack.c.l.b16 %v182
    %v261 = vunpack.c.l.b16 %v183
    %v262 = vunpack.c.h.b16 %v183
    %v263 = vunpack.c.l.b16 %v184
    %v264 = vunpack.c.l.b16 %v185
    %v265 = vunpack.c.h.b16 %v185
    %v266 = vunpack.c.l.b16 %v186
    %v267 = vpack.c.b16 %v222, %v219
    %v268 = vpack.c.b16 %v223, %v220
    %v269 = vpack.c.b16 %v224, %v221
    %v270 = vpack.c.b16 %v228, %v225
    %v271 = vpack.c.b16 %v229, %v226
    %v272 = vpack.c.b16 %v230, %v227
    %v273 = vpack.c.b16 %v234, %v231
    %v274 = vpack.c.b16 %v235, %v232
    %v275 = vpack.c.b16 %v236, %v233
    %v276 = vpack.c.b16 %v240, %v237
    %v277 = vpack.c.b16 %v241, %v238
    %v278 = vpack.c.b16 %v242, %v239
    %v279 = vpack.c.b16 %v246, %v243
    %v280 = vpack.c.b16 %v247, %v244
    %v281 = vpack.c.b16 %v248, %v245
    %v282 = vpack.c.b16 %v252, %v249
    %v283 = vpack.c.b16 %v253, %v250
    %v284 = vpack.c.b16 %v254, %v251
    %v285 = vpack.c.b16 %v258, %v255
    %v286 = vpack.c.b16 %v259, %v256
    %v287 = vpack.c.b16 %v260, %v257
    %v288 = vpack.c.b16 %v264, %v261
    %v289 = vpack.c.b16 %v265, %v262
    %v290 = vpack.c.b16 %v266, %v263
    %315 = vmatpush.bf16.msra.mxu0 %v288
    %316 = vmatpush.bf16.msra.mxu0 %v285
    %317 = vmatpush.bf16.msra.mxu0 %v282
    %318 = vmatpush.bf16.msra.mxu0 %v279
    %319 = vmatpush.bf16.msra.mxu0 %v276
    %320 = vmatpush.bf16.msra.mxu0 %v273
    %321 = vmatpush.bf16.msra.mxu0 %v270
    %322 = vmatpush.bf16.msra.mxu0 %v267
    %323 = vmatmul.bf16.gmra.mxu0 %v147
    %v324 = vpop.f32.mrf.mxu0
    %v325 = vadd.f32 0.0, %v324
    %v326 = vpop.f32.mrf.mxu0
    %v327 = vadd.f32 0.0, %v326
    %328 = vmatmul.bf16.gmra.mxu0 %v148
    %v329 = vpop.f32.mrf.mxu0
    %v330 = vadd.f32 0.0, %v329
    %v331 = vpop.f32.mrf.mxu0
    %v332 = vadd.f32 0.0, %v331
    %333 = vmatmul.bf16.gmra.mxu0 %v149
    %v334 = vpop.f32.mrf.mxu0
    %v335 = vadd.f32 0.0, %v334
    %v336 = vpop.f32.mrf.mxu0
    %v337 = vadd.f32 0.0, %v336
    %338 = vmatmul.bf16.gmra.mxu0 %v150
    %v339 = vpop.f32.mrf.mxu0
    %v340 = vadd.f32 0.0, %v339
    %v341 = vpop.f32.mrf.mxu0
    %v342 = vadd.f32 0.0, %v341
    %343 = vmatmul.bf16.gmra.mxu0 %v151
    %v344 = vpop.f32.mrf.mxu0
    %v345 = vadd.f32 0.0, %v344
    %v346 = vpop.f32.mrf.mxu0
    %v347 = vadd.f32 0.0, %v346
    %348 = vmatmul.bf16.gmra.mxu0 %v152
    %v349 = vpop.f32.mrf.mxu0
    %v350 = vadd.f32 0.0, %v349
    %v351 = vpop.f32.mrf.mxu0
    %v352 = vadd.f32 0.0, %v351
    %353 = vmatmul.bf16.gmra.mxu0 %v153
    %v354 = vpop.f32.mrf.mxu0
    %v355 = vadd.f32 0.0, %v354
    %v356 = vpop.f32.mrf.mxu0
    %v357 = vadd.f32 0.0, %v356
    %358 = vmatmul.bf16.gmra.mxu0 %v154
    %v359 = vpop.f32.mrf.mxu0
    %v360 = vadd.f32 0.0, %v359
    %v361 = vpop.f32.mrf.mxu0
    %v362 = vadd.f32 0.0, %v361
    %363 = vdwg.mxu0
    %364 = vmatpush.bf16.msra.mxu0 %v289
    %365 = vmatpush.bf16.msra.mxu0 %v286
    %366 = vmatpush.bf16.msra.mxu0 %v283
    %367 = vmatpush.bf16.msra.mxu0 %v280
    %368 = vmatpush.bf16.msra.mxu0 %v277
    %369 = vmatpush.bf16.msra.mxu0 %v274
    %370 = vmatpush.bf16.msra.mxu0 %v271
    %371 = vmatpush.bf16.msra.mxu0 %v268
    %372 = vmatmul.bf16.gmra.mxu0 %v147
    %v373 = vpop.f32.mrf.mxu0
    %v374 = vadd.f32 0.0, %v373
    %v375 = vpop.f32.mrf.mxu0
    %v376 = vadd.f32 0.0, %v375
    %377 = vmatmul.bf16.gmra.mxu0 %v148
    %v378 = vpop.f32.mrf.mxu0
    %v379 = vadd.f32 0.0, %v378
    %v380 = vpop.f32.mrf.mxu0
    %v381 = vadd.f32 0.0, %v380
    %382 = vmatmul.bf16.gmra.mxu0 %v149
    %v383 = vpop.f32.mrf.mxu0
    %v384 = vadd.f32 0.0, %v383
    %v385 = vpop.f32.mrf.mxu0
    %v386 = vadd.f32 0.0, %v385
    %387 = vmatmul.bf16.gmra.mxu0 %v150
    %v388 = vpop.f32.mrf.mxu0
    %v389 = vadd.f32 0.0, %v388
    %v390 = vpop.f32.mrf.mxu0
    %v391 = vadd.f32 0.0, %v390
    %392 = vmatmul.bf16.gmra.mxu0 %v151
    %v393 = vpop.f32.mrf.mxu0
    %v394 = vadd.f32 0.0, %v393
    %v395 = vpop.f32.mrf.mxu0
    %v396 = vadd.f32 0.0, %v395
    %397 = vmatmul.bf16.gmra.mxu0 %v152
    %v398 = vpop.f32.mrf.mxu0
    %v399 = vadd.f32 0.0, %v398
    %v400 = vpop.f32.mrf.mxu0
    %v401 = vadd.f32 0.0, %v400
    %402 = vmatmul.bf16.gmra.mxu0 %v153
    %v403 = vpop.f32.mrf.mxu0
    %v404 = vadd.f32 0.0, %v403
    %v405 = vpop.f32.mrf.mxu0
    %v406 = vadd.f32 0.0, %v405
    %407 = vmatmul.bf16.gmra.mxu0 %v154
    %v408 = vpop.f32.mrf.mxu0
    %v409 = vadd.f32 0.0, %v408
    %v410 = vpop.f32.mrf.mxu0
    %v411 = vadd.f32 0.0, %v410
    %412 = vdwg.mxu0
    %413 = vmatpush.bf16.msra.mxu0 %v290
    %414 = vmatpush.bf16.msra.mxu0 %v287
    %415 = vmatpush.bf16.msra.mxu0 %v284
    %416 = vmatpush.bf16.msra.mxu0 %v281
    %417 = vmatpush.bf16.msra.mxu0 %v278
    %418 = vmatpush.bf16.msra.mxu0 %v275
    %419 = vmatpush.bf16.msra.mxu0 %v272
    %420 = vmatpush.bf16.msra.mxu0 %v269
    %421 = vmatmul.bf16.gmra.mxu0 %v147
    %v422 = vpop.f32.mrf.mxu0
    %v423 = vadd.f32 0.0, %v422
    %v424 = vpop.f32.mrf.mxu0
    %v425 = vadd.f32 0.0, %v424
    %426 = vmatmul.bf16.gmra.mxu0 %v148
    %v427 = vpop.f32.mrf.mxu0
    %v428 = vadd.f32 0.0, %v427
    %v429 = vpop.f32.mrf.mxu0
    %v430 = vadd.f32 0.0, %v429
    %431 = vmatmul.bf16.gmra.mxu0 %v149
    %v432 = vpop.f32.mrf.mxu0
    %v433 = vadd.f32 0.0, %v432
    %v434 = vpop.f32.mrf.mxu0
    %v435 = vadd.f32 0.0, %v434
    %436 = vmatmul.bf16.gmra.mxu0 %v150
    %v437 = vpop.f32.mrf.mxu0
    %v438 = vadd.f32 0.0, %v437
    %v439 = vpop.f32.mrf.mxu0
    %v440 = vadd.f32 0.0, %v439
    %441 = vmatmul.bf16.gmra.mxu0 %v151
    %v442 = vpop.f32.mrf.mxu0
    %v443 = vadd.f32 0.0, %v442
    %v444 = vpop.f32.mrf.mxu0
    %v445 = vadd.f32 0.0, %v444
    %446 = vmatmul.bf16.gmra.mxu0 %v152
    %v447 = vpop.f32.mrf.mxu0
    %v448 = vadd.f32 0.0, %v447
    %v449 = vpop.f32.mrf.mxu0
    %v450 = vadd.f32 0.0, %v449
    %451 = vmatmul.bf16.gmra.mxu0 %v153
    %v452 = vpop.f32.mrf.mxu0
    %v453 = vadd.f32 0.0, %v452
    %v454 = vpop.f32.mrf.mxu0
    %v455 = vadd.f32 0.0, %v454
    %456 = vmatmul.bf16.gmra.mxu0 %v154
    %v457 = vpop.f32.mrf.mxu0
    %v458 = vadd.f32 0.0, %v457
    %v459 = vpop.f32.mrf.mxu0
    %v460 = vadd.f32 0.0, %v459
    %461 = vdwg.mxu0
    %v462 = vmax.f32 %v325, 0.0
    %v463 = vmax.f32 %v374, 0.0
    %v464 = vmax.f32 %v423, 0.0
    %v465 = vmax.f32 %v327, 0.0
    %v466 = vmax.f32 %v376, 0.0
    %v467 = vmax.f32 %v425, 0.0
    %v468 = vmax.f32 %v330, 0.0
    %v469 = vmax.f32 %v379, 0.0
    %v470 = vmax.f32 %v428, 0.0
    %v471 = vmax.f32 %v332, 0.0
    %v472 = vmax.f32 %v381, 0.0
    %v473 = vmax.f32 %v430, 0.0
    %v474 = vmax.f32 %v335, 0.0
    %v475 = vmax.f32 %v384, 0.0
    %v476 = vmax.f32 %v433, 0.0
    %v477 = vmax.f32 %v337, 0.0
    %v478 = vmax.f32 %v386, 0.0
    %v479 = vmax.f32 %v435, 0.0
    %v480 = vmax.f32 %v340, 0.0
    %v481 = vmax.f32 %v389, 0.0
    %v482 = vmax.f32 %v438, 0.0
    %v483 = vmax.f32 %v342, 0.0
    %v484 = vmax.f32 %v391, 0.0
    %v485 = vmax.f32 %v440, 0.0
    %v486 = vmax.f32 %v345, 0.0
    %v487 = vmax.f32 %v394, 0.0
    %v488 = vmax.f32 %v443, 0.0
    %v489 = vmax.f32 %v347, 0.0
    %v490 = vmax.f32 %v396, 0.0
    %v491 = vmax.f32 %v445, 0.0
    %v492 = vmax.f32 %v350, 0.0
    %v493 = vmax.f32 %v399, 0.0
    %v494 = vmax.f32 %v448, 0.0
    %v495 = vmax.f32 %v352, 0.0
    %v496 = vmax.f32 %v401, 0.0
    %v497 = vmax.f32 %v450, 0.0
    %v498 = vmax.f32 %v355, 0.0
    %v499 = vmax.f32 %v404, 0.0
    %v500 = vmax.f32 %v453, 0.0
    %v501 = vmax.f32 %v357, 0.0
    %v502 = vmax.f32 %v406, 0.0
    %v503 = vmax.f32 %v455, 0.0
    %v504 = vmax.f32 %v360, 0.0
    %v505 = vmax.f32 %v409, 0.0
    %v506 = vmax.f32 %v458, 0.0
    %v507 = vmax.f32 %v362, 0.0
    %v508 = vmax.f32 %v411, 0.0
    %v509 = vmax.f32 %v460, 0.0
    %v510 = vmul.f32 %v462, %v462
    %v511 = vmul.f32 %v463, %v463
    %v512 = vmul.f32 %v464, %v464
    %v513 = vmul.f32 %v465, %v465
    %v514 = vmul.f32 %v466, %v466
    %v515 = vmul.f32 %v467, %v467
    %v516 = vmul.f32 %v468, %v468
    %v517 = vmul.f32 %v469, %v469
    %v518 = vmul.f32 %v470, %v470
    %v519 = vmul.f32 %v471, %v471
    %v520 = vmul.f32 %v472, %v472
    %v521 = vmul.f32 %v473, %v473
    %v522 = vmul.f32 %v474, %v474
    %v523 = vmul.f32 %v475, %v475
    %v524 = vmul.f32 %v476, %v476
    %v525 = vmul.f32 %v477, %v477
    %v526 = vmul.f32 %v478, %v478
    %v527 = vmul.f32 %v479, %v479
    %v528 = vmul.f32 %v480, %v480
    %v529 = vmul.f32 %v481, %v481
    %v530 = vmul.f32 %v482, %v482
    %v531 = vmul.f32 %v483, %v483
    %v532 = vmul.f32 %v484, %v484
    %v533 = vmul.f32 %v485, %v485
    %v534 = vmul.f32 %v486, %v486
    %v535 = vmul.f32 %v487, %v487
    %v536 = vmul.f32 %v488, %v488
    %v537 = vmul.f32 %v489, %v489
    %v538 = vmul.f32 %v490, %v490
    %v539 = vmul.f32 %v491, %v491
    %v540 = vmul.f32 %v492, %v492
    %v541 = vmul.f32 %v493, %v493
    %v542 = vmul.f32 %v494, %v494
    %v543 = vmul.f32 %v495, %v495
    %v544 = vmul.f32 %v496, %v496
    %v545 = vmul.f32 %v497, %v497
    %v546 = vmul.f32 %v498, %v498
    %v547 = vmul.f32 %v499, %v499
    %v548 = vmul.f32 %v500, %v500
    %v549 = vmul.f32 %v501, %v501
    %v550 = vmul.f32 %v502, %v502
    %v551 = vmul.f32 %v503, %v503
    %v552 = vmul.f32 %v504, %v504
    %v553 = vmul.f32 %v505, %v505
    %v554 = vmul.f32 %v506, %v506
    %v555 = vmul.f32 %v507, %v507
    %v556 = vmul.f32 %v508, %v508
    %v557 = vmul.f32 %v509, %v509
    %v558 = vpack.c.bf16 %v513, %v510
    %v559 = vpack.c.bf16 %v514, %v511
    %v560 = vpack.c.bf16 %v515, %v512
    %v561 = vpack.c.bf16 %v519, %v516
    %v562 = vpack.c.bf16 %v520, %v517
    %v563 = vpack.c.bf16 %v521, %v518
    %v564 = vpack.c.bf16 %v525, %v522
    %v565 = vpack.c.bf16 %v526, %v523
    %v566 = vpack.c.bf16 %v527, %v524
    %v567 = vpack.c.bf16 %v531, %v528
    %v568 = vpack.c.bf16 %v532, %v529
    %v569 = vpack.c.bf16 %v533, %v530
    %v570 = vpack.c.bf16 %v537, %v534
    %v571 = vpack.c.bf16 %v538, %v535
    %v572 = vpack.c.bf16 %v539, %v536
    %v573 = vpack.c.bf16 %v543, %v540
    %v574 = vpack.c.bf16 %v544, %v541
    %v575 = vpack.c.bf16 %v545, %v542
    %v576 = vpack.c.bf16 %v549, %v546
    %v577 = vpack.c.bf16 %v550, %v547
    %v578 = vpack.c.bf16 %v551, %v548
    %v579 = vpack.c.bf16 %v555, %v552
    %v580 = vpack.c.bf16 %v556, %v553
    %v581 = vpack.c.bf16 %v557, %v554
    %v582 = vld [vmem:[%s6] sm:$0xf]
    %v583 = vld [vmem:[%s6 + $0x4] sm:$0xf]
    %v584 = vld [vmem:[%s6 + $0x8] sm:$0xf]
    %v585 = vld [vmem:[%s6 + $0xc] sm:$0xf]
    %v586 = vld [vmem:[%s6 + $0x10] sm:$0xf]
    %v587 = vld [vmem:[%s6 + $0x14] sm:$0xf]
    %v588 = vld [vmem:[%s6 + $0x18] sm:$0xf]
    %v589 = vld [vmem:[%s6 + $0x1c] sm:$0xf]
    %v590 = vld [vmem:[%s6 + $0x20] sm:$0xf]
    %v591 = vld [vmem:[%s6 + $0x24] sm:$0xf]
    %v592 = vld [vmem:[%s6 + $0x28] sm:$0xf]
    %v593 = vld [vmem:[%s6 + $0x2c] sm:$0xf]
    %v594 = vld [vmem:[%s6 + $0x30] sm:$0xf]
    %v595 = vld [vmem:[%s6 + $0x34] sm:$0xf]
    %v596 = vld [vmem:[%s6 + $0x38] sm:$0xf]
    %v597 = vld [vmem:[%s6 + $0x3c] sm:$0xf]
    %v598 = vld [vmem:[%s6 + $0x40] sm:$0xf]
    %v599 = vld [vmem:[%s6 + $0x44] sm:$0xf]
    %v600 = vld [vmem:[%s6 + $0x48] sm:$0xf]
    %v601 = vld [vmem:[%s6 + $0x4c] sm:$0xf]
    %v602 = vld [vmem:[%s6 + $0x50] sm:$0xf]
    %v603 = vld [vmem:[%s6 + $0x54] sm:$0xf]
    %v604 = vld [vmem:[%s6 + $0x58] sm:$0xf]
    %v605 = vld [vmem:[%s6 + $0x5c] sm:$0xf]
    %v606 = vld [vmem:[%s6 + $0x60] sm:$0xf]
    %v607 = vld [vmem:[%s6 + $0x64] sm:$0xf]
    %v608 = vld [vmem:[%s6 + $0x68] sm:$0xf]
    %v609 = vld [vmem:[%s6 + $0x6c] sm:$0xf]
    %v610 = vld [vmem:[%s6 + $0x70] sm:$0xf]
    %v611 = vld [vmem:[%s6 + $0x74] sm:$0xf]
    %v612 = vld [vmem:[%s6 + $0x78] sm:$0xf]
    %v613 = vld [vmem:[%s6 + $0x7c] sm:$0xf]
    %v614 = vld [vmem:[%s6 + $0x80] sm:$0xf]
    %v615 = vld [vmem:[%s6 + $0x84] sm:$0xf]
    %v616 = vld [vmem:[%s6 + $0x88] sm:$0xf]
    %v617 = vld [vmem:[%s6 + $0x8c] sm:$0xf]
    %v618 = vld [vmem:[%s6 + $0x90] sm:$0xf]
    %v619 = vld [vmem:[%s6 + $0x94] sm:$0xf]
    %v620 = vld [vmem:[%s6 + $0x98] sm:$0xf]
    %v621 = vld [vmem:[%s6 + $0x9c] sm:$0xf]
    %v622 = vld [vmem:[%s6 + $0xa0] sm:$0xf]
    %v623 = vld [vmem:[%s6 + $0xa4] sm:$0xf]
    %v624 = vld [vmem:[%s6 + $0xa8] sm:$0xf]
    %v625 = vld [vmem:[%s6 + $0xac] sm:$0xf]
    %v626 = vld [vmem:[%s6 + $0xb0] sm:$0xf]
    %v627 = vld [vmem:[%s6 + $0xb4] sm:$0xf]
    %v628 = vld [vmem:[%s6 + $0xb8] sm:$0xf]
    %v629 = vld [vmem:[%s6 + $0xbc] sm:$0xf]
    %v678 = vunpack.c.l.b16 %v582
    %v679 = vunpack.c.l.b16 %v583
    %v680 = vunpack.c.l.b16 %v584
    %v681 = vunpack.c.l.b16 %v585
    %v682 = vunpack.c.l.b16 %v586
    %v683 = vunpack.c.l.b16 %v587
    %v684 = vunpack.c.l.b16 %v588
    %v685 = vunpack.c.l.b16 %v589
    %v686 = vunpack.c.l.b16 %v590
    %v687 = vunpack.c.l.b16 %v591
    %v688 = vunpack.c.l.b16 %v592
    %v689 = vunpack.c.l.b16 %v593
    %v690 = vunpack.c.l.b16 %v594
    %v691 = vunpack.c.l.b16 %v595
    %v692 = vunpack.c.l.b16 %v596
    %v693 = vunpack.c.l.b16 %v597
    %v694 = vunpack.c.l.b16 %v598
    %v695 = vunpack.c.l.b16 %v599
    %v696 = vunpack.c.l.b16 %v600
    %v697 = vunpack.c.l.b16 %v601
    %v698 = vunpack.c.l.b16 %v602
    %v699 = vunpack.c.l.b16 %v603
    %v700 = vunpack.c.l.b16 %v604
    %v701 = vunpack.c.l.b16 %v605
    %v702 = vunpack.c.l.b16 %v606
    %v703 = vunpack.c.l.b16 %v607
    %v704 = vunpack.c.l.b16 %v608
    %v705 = vunpack.c.l.b16 %v609
    %v706 = vunpack.c.l.b16 %v610
    %v707 = vunpack.c.l.b16 %v611
    %v708 = vunpack.c.l.b16 %v612
    %v709 = vunpack.c.l.b16 %v613
    %v710 = vunpack.c.l.b16 %v614
    %v711 = vunpack.c.l.b16 %v615
    %v712 = vunpack.c.l.b16 %v616
    %v713 = vunpack.c.l.b16 %v617
    %v714 = vunpack.c.l.b16 %v618
    %v715 = vunpack.c.l.b16 %v619
    %v716 = vunpack.c.l.b16 %v620
    %v717 = vunpack.c.l.b16 %v621
    %v718 = vunpack.c.l.b16 %v622
    %v719 = vunpack.c.l.b16 %v623
    %v720 = vunpack.c.l.b16 %v624
    %v721 = vunpack.c.l.b16 %v625
    %v722 = vunpack.c.l.b16 %v626
    %v723 = vunpack.c.l.b16 %v627
    %v724 = vunpack.c.l.b16 %v628
    %v725 = vunpack.c.l.b16 %v629
    %v726 = vpack.c.b16 %v679, %v678
    %v727 = vpack.c.b16 %v681, %v680
    %v728 = vpack.c.b16 %v683, %v682
    %v729 = vpack.c.b16 %v685, %v684
    %v730 = vpack.c.b16 %v687, %v686
    %v731 = vpack.c.b16 %v689, %v688
    %v732 = vpack.c.b16 %v691, %v690
    %v733 = vpack.c.b16 %v693, %v692
    %v734 = vpack.c.b16 %v695, %v694
    %v735 = vpack.c.b16 %v697, %v696
    %v736 = vpack.c.b16 %v699, %v698
    %v737 = vpack.c.b16 %v701, %v700
    %v738 = vpack.c.b16 %v703, %v702
    %v739 = vpack.c.b16 %v705, %v704
    %v740 = vpack.c.b16 %v707, %v706
    %v741 = vpack.c.b16 %v709, %v708
    %v742 = vpack.c.b16 %v711, %v710
    %v743 = vpack.c.b16 %v713, %v712
    %v744 = vpack.c.b16 %v715, %v714
    %v745 = vpack.c.b16 %v717, %v716
    %v746 = vpack.c.b16 %v719, %v718
    %v747 = vpack.c.b16 %v721, %v720
    %v748 = vpack.c.b16 %v723, %v722
    %v749 = vpack.c.b16 %v725, %v724
    %774 = vmatpush.bf16.msra.mxu0 %v733
    %775 = vmatpush.bf16.msra.mxu0 %v732
    %776 = vmatpush.bf16.msra.mxu0 %v731
    %777 = vmatpush.bf16.msra.mxu0 %v730
    %778 = vmatpush.bf16.msra.mxu0 %v729
    %779 = vmatpush.bf16.msra.mxu0 %v728
    %780 = vmatpush.bf16.msra.mxu0 %v727
    %781 = vmatpush.bf16.msra.mxu0 %v726
    %782 = vmatmul.bf16.gmra.mxu0 %v558
    %v783 = vpop.f32.mrf.mxu0
    %v784 = vadd.f32 0.0, %v783
    %v785 = vpop.f32.mrf.mxu0
    %v786 = vadd.f32 0.0, %v785
    %787 = vmatmul.bf16.gmra.mxu0 %v561
    %v788 = vpop.f32.mrf.mxu0
    %v789 = vadd.f32 0.0, %v788
    %v790 = vpop.f32.mrf.mxu0
    %v791 = vadd.f32 0.0, %v790
    %792 = vmatmul.bf16.gmra.mxu0 %v564
    %v793 = vpop.f32.mrf.mxu0
    %v794 = vadd.f32 0.0, %v793
    %v795 = vpop.f32.mrf.mxu0
    %v796 = vadd.f32 0.0, %v795
    %797 = vmatmul.bf16.gmra.mxu0 %v567
    %v798 = vpop.f32.mrf.mxu0
    %v799 = vadd.f32 0.0, %v798
    %v800 = vpop.f32.mrf.mxu0
    %v801 = vadd.f32 0.0, %v800
    %802 = vmatmul.bf16.gmra.mxu0 %v570
    %v803 = vpop.f32.mrf.mxu0
    %v804 = vadd.f32 0.0, %v803
    %v805 = vpop.f32.mrf.mxu0
    %v806 = vadd.f32 0.0, %v805
    %807 = vmatmul.bf16.gmra.mxu0 %v573
    %v808 = vpop.f32.mrf.mxu0
    %v809 = vadd.f32 0.0, %v808
    %v810 = vpop.f32.mrf.mxu0
    %v811 = vadd.f32 0.0, %v810
    %812 = vmatmul.bf16.gmra.mxu0 %v576
    %v813 = vpop.f32.mrf.mxu0
    %v814 = vadd.f32 0.0, %v813
    %v815 = vpop.f32.mrf.mxu0
    %v816 = vadd.f32 0.0, %v815
    %817 = vmatmul.bf16.gmra.mxu0 %v579
    %v818 = vpop.f32.mrf.mxu0
    %v819 = vadd.f32 0.0, %v818
    %v820 = vpop.f32.mrf.mxu0
    %v821 = vadd.f32 0.0, %v820
    %822 = vdwg.mxu0
    %823 = vmatpush.bf16.msra.mxu0 %v741
    %824 = vmatpush.bf16.msra.mxu0 %v740
    %825 = vmatpush.bf16.msra.mxu0 %v739
    %826 = vmatpush.bf16.msra.mxu0 %v738
    %827 = vmatpush.bf16.msra.mxu0 %v737
    %828 = vmatpush.bf16.msra.mxu0 %v736
    %829 = vmatpush.bf16.msra.mxu0 %v735
    %830 = vmatpush.bf16.msra.mxu0 %v734
    %831 = vmatmul.bf16.gmra.mxu0 %v559
    %v832 = vpop.f32.mrf.mxu0
    %v833 = vadd.f32 %v784, %v832
    %v834 = vpop.f32.mrf.mxu0
    %v835 = vadd.f32 %v786, %v834
    %836 = vmatmul.bf16.gmra.mxu0 %v562
    %v837 = vpop.f32.mrf.mxu0
    %v838 = vadd.f32 %v789, %v837
    %v839 = vpop.f32.mrf.mxu0
    %v840 = vadd.f32 %v791, %v839
    %841 = vmatmul.bf16.gmra.mxu0 %v565
    %v842 = vpop.f32.mrf.mxu0
    %v843 = vadd.f32 %v794, %v842
    %v844 = vpop.f32.mrf.mxu0
    %v845 = vadd.f32 %v796, %v844
    %846 = vmatmul.bf16.gmra.mxu0 %v568
    %v847 = vpop.f32.mrf.mxu0
    %v848 = vadd.f32 %v799, %v847
    %v849 = vpop.f32.mrf.mxu0
    %v850 = vadd.f32 %v801, %v849
    %851 = vmatmul.bf16.gmra.mxu0 %v571
    %v852 = vpop.f32.mrf.mxu0
    %v853 = vadd.f32 %v804, %v852
    %v854 = vpop.f32.mrf.mxu0
    %v855 = vadd.f32 %v806, %v854
    %856 = vmatmul.bf16.gmra.mxu0 %v574
    %v857 = vpop.f32.mrf.mxu0
    %v858 = vadd.f32 %v809, %v857
    %v859 = vpop.f32.mrf.mxu0
    %v860 = vadd.f32 %v811, %v859
    %861 = vmatmul.bf16.gmra.mxu0 %v577
    %v862 = vpop.f32.mrf.mxu0
    %v863 = vadd.f32 %v814, %v862
    %v864 = vpop.f32.mrf.mxu0
    %v865 = vadd.f32 %v816, %v864
    %866 = vmatmul.bf16.gmra.mxu0 %v580
    %v867 = vpop.f32.mrf.mxu0
    %v868 = vadd.f32 %v819, %v867
    %v869 = vpop.f32.mrf.mxu0
    %v870 = vadd.f32 %v821, %v869
    %871 = vdwg.mxu0
    %872 = vmatpush.bf16.msra.mxu0 %v749
    %873 = vmatpush.bf16.msra.mxu0 %v748
    %874 = vmatpush.bf16.msra.mxu0 %v747
    %875 = vmatpush.bf16.msra.mxu0 %v746
    %876 = vmatpush.bf16.msra.mxu0 %v745
    %877 = vmatpush.bf16.msra.mxu0 %v744
    %878 = vmatpush.bf16.msra.mxu0 %v743
    %879 = vmatpush.bf16.msra.mxu0 %v742
    %880 = vmatmul.bf16.gmra.mxu0 %v560
    %v881 = vpop.f32.mrf.mxu0
    %v882 = vadd.f32 %v833, %v881
    %v883 = vpop.f32.mrf.mxu0
    %v884 = vadd.f32 %v835, %v883
    %885 = vmatmul.bf16.gmra.mxu0 %v563
    %v886 = vpop.f32.mrf.mxu0
    %v887 = vadd.f32 %v838, %v886
    %v888 = vpop.f32.mrf.mxu0
    %v889 = vadd.f32 %v840, %v888
    %890 = vmatmul.bf16.gmra.mxu0 %v566
    %v891 = vpop.f32.mrf.mxu0
    %v892 = vadd.f32 %v843, %v891
    %v893 = vpop.f32.mrf.mxu0
    %v894 = vadd.f32 %v845, %v893
    %895 = vmatmul.bf16.gmra.mxu0 %v569
    %v896 = vpop.f32.mrf.mxu0
    %v897 = vadd.f32 %v848, %v896
    %v898 = vpop.f32.mrf.mxu0
    %v899 = vadd.f32 %v850, %v898
    %900 = vmatmul.bf16.gmra.mxu0 %v572
    %v901 = vpop.f32.mrf.mxu0
    %v902 = vadd.f32 %v853, %v901
    %v903 = vpop.f32.mrf.mxu0
    %v904 = vadd.f32 %v855, %v903
    %905 = vmatmul.bf16.gmra.mxu0 %v575
    %v906 = vpop.f32.mrf.mxu0
    %v907 = vadd.f32 %v858, %v906
    %v908 = vpop.f32.mrf.mxu0
    %v909 = vadd.f32 %v860, %v908
    %910 = vmatmul.bf16.gmra.mxu0 %v578
    %v911 = vpop.f32.mrf.mxu0
    %v912 = vadd.f32 %v863, %v911
    %v913 = vpop.f32.mrf.mxu0
    %v914 = vadd.f32 %v865, %v913
    %915 = vmatmul.bf16.gmra.mxu0 %v581
    %v916 = vpop.f32.mrf.mxu0
    %v917 = vadd.f32 %v868, %v916
    %v918 = vpop.f32.mrf.mxu0
    %v919 = vadd.f32 %v870, %v918
    %920 = vdwg.mxu0
    %v921 = vpack.c.bf16 %v132, %v131
    %v922 = vpack.c.bf16 %v134, %v133
    %v923 = vpack.c.bf16 %v136, %v135
    %v924 = vpack.c.bf16 %v138, %v137
    %v925 = vpack.c.bf16 %v140, %v139
    %v926 = vpack.c.bf16 %v142, %v141
    %v927 = vpack.c.bf16 %v144, %v143
    %v928 = vpack.c.bf16 %v146, %v145
    %v929 = vld [vmem:[%s5] sm:$0xf]
    %v930 = vld [vmem:[%s5 + $0x4] sm:$0xf]
    %v931 = vld [vmem:[%s5 + $0x8] sm:$0xf]
    %v932 = vld [vmem:[%s5 + $0xc] sm:$0xf]
    %v933 = vld [vmem:[%s5 + $0x10] sm:$0xf]
    %v934 = vld [vmem:[%s5 + $0x14] sm:$0xf]
    %v935 = vld [vmem:[%s5 + $0x18] sm:$0xf]
    %v936 = vld [vmem:[%s5 + $0x1c] sm:$0xf]
    %v937 = vld [vmem:[%s5 + $0x20] sm:$0xf]
    %v938 = vld [vmem:[%s5 + $0x24] sm:$0xf]
    %v939 = vld [vmem:[%s5 + $0x28] sm:$0xf]
    %v940 = vld [vmem:[%s5 + $0x2c] sm:$0xf]
    %v941 = vld [vmem:[%s5 + $0x30] sm:$0xf]
    %v942 = vld [vmem:[%s5 + $0x34] sm:$0xf]
    %v943 = vld [vmem:[%s5 + $0x38] sm:$0xf]
    %v944 = vld [vmem:[%s5 + $0x3c] sm:$0xf]
    %v961 = vunpack.c.l.b16 %v929
    %v962 = vunpack.c.l.b16 %v930
    %v963 = vunpack.c.l.b16 %v931
    %v964 = vunpack.c.l.b16 %v932
    %v965 = vunpack.c.l.b16 %v933
    %v966 = vunpack.c.l.b16 %v934
    %v967 = vunpack.c.l.b16 %v935
    %v968 = vunpack.c.l.b16 %v936
    %v969 = vunpack.c.l.b16 %v937
    %v970 = vunpack.c.l.b16 %v938
    %v971 = vunpack.c.l.b16 %v939
    %v972 = vunpack.c.l.b16 %v940
    %v973 = vunpack.c.l.b16 %v941
    %v974 = vunpack.c.l.b16 %v942
    %v975 = vunpack.c.l.b16 %v943
    %v976 = vunpack.c.l.b16 %v944
    %v977 = vpack.c.b16 %v962, %v961
    %v978 = vpack.c.b16 %v964, %v963
    %v979 = vpack.c.b16 %v966, %v965
    %v980 = vpack.c.b16 %v968, %v967
    %v981 = vpack.c.b16 %v970, %v969
    %v982 = vpack.c.b16 %v972, %v971
    %v983 = vpack.c.b16 %v974, %v973
    %v984 = vpack.c.b16 %v976, %v975
    %993 = vmatpush.bf16.msra.mxu0 %v984
    %994 = vmatpush.bf16.msra.mxu0 %v983
    %995 = vmatpush.bf16.msra.mxu0 %v982
    %996 = vmatpush.bf16.msra.mxu0 %v981
    %997 = vmatpush.bf16.msra.mxu0 %v980
    %998 = vmatpush.bf16.msra.mxu0 %v979
    %999 = vmatpush.bf16.msra.mxu0 %v978
    %1000 = vmatpush.bf16.msra.mxu0 %v977
    %1001 = vmatmul.bf16.gmra.mxu0 %v921
    %v1002 = vpop.f32.mrf.mxu0
    %v1003 = vadd.f32 0.0, %v1002
    %v1004 = vpop.f32.mrf.mxu0
    %v1005 = vadd.f32 0.0, %v1004
    %1006 = vmatmul.bf16.gmra.mxu0 %v922
    %v1007 = vpop.f32.mrf.mxu0
    %v1008 = vadd.f32 0.0, %v1007
    %v1009 = vpop.f32.mrf.mxu0
    %v1010 = vadd.f32 0.0, %v1009
    %1011 = vmatmul.bf16.gmra.mxu0 %v923
    %v1012 = vpop.f32.mrf.mxu0
    %v1013 = vadd.f32 0.0, %v1012
    %v1014 = vpop.f32.mrf.mxu0
    %v1015 = vadd.f32 0.0, %v1014
    %1016 = vmatmul.bf16.gmra.mxu0 %v924
    %v1017 = vpop.f32.mrf.mxu0
    %v1018 = vadd.f32 0.0, %v1017
    %v1019 = vpop.f32.mrf.mxu0
    %v1020 = vadd.f32 0.0, %v1019
    %1021 = vmatmul.bf16.gmra.mxu0 %v925
    %v1022 = vpop.f32.mrf.mxu0
    %v1023 = vadd.f32 0.0, %v1022
    %v1024 = vpop.f32.mrf.mxu0
    %v1025 = vadd.f32 0.0, %v1024
    %1026 = vmatmul.bf16.gmra.mxu0 %v926
    %v1027 = vpop.f32.mrf.mxu0
    %v1028 = vadd.f32 0.0, %v1027
    %v1029 = vpop.f32.mrf.mxu0
    %v1030 = vadd.f32 0.0, %v1029
    %1031 = vmatmul.bf16.gmra.mxu0 %v927
    %v1032 = vpop.f32.mrf.mxu0
    %v1033 = vadd.f32 0.0, %v1032
    %v1034 = vpop.f32.mrf.mxu0
    %v1035 = vadd.f32 0.0, %v1034
    %1036 = vmatmul.bf16.gmra.mxu0 %v928
    %v1037 = vpop.f32.mrf.mxu0
    %v1038 = vadd.f32 0.0, %v1037
    %v1039 = vpop.f32.mrf.mxu0
    %v1040 = vadd.f32 0.0, %v1039
    %1041 = vdwg.mxu0
    %v1042 = vxor.u32 %v1003, 2147483648
    %v1043 = vxor.u32 %v1005, 2147483648
    %v1044 = vxor.u32 %v1008, 2147483648
    %v1045 = vxor.u32 %v1010, 2147483648
    %v1046 = vxor.u32 %v1013, 2147483648
    %v1047 = vxor.u32 %v1015, 2147483648
    %v1048 = vxor.u32 %v1018, 2147483648
    %v1049 = vxor.u32 %v1020, 2147483648
    %v1050 = vxor.u32 %v1023, 2147483648
    %v1051 = vxor.u32 %v1025, 2147483648
    %v1052 = vxor.u32 %v1028, 2147483648
    %v1053 = vxor.u32 %v1030, 2147483648
    %v1054 = vxor.u32 %v1033, 2147483648
    %v1055 = vxor.u32 %v1035, 2147483648
    %v1056 = vxor.u32 %v1038, 2147483648
    %v1057 = vxor.u32 %v1040, 2147483648
    %v1058 = vmul.f32 %v1042, 1.442695
    %v1059 = vpow.pop %v1058
    %v1060 = vmul.f32 %v1043, 1.442695
    %v1061 = vpow.pop %v1060
    %v1062 = vmul.f32 %v1044, 1.442695
    %v1063 = vpow.pop %v1062
    %v1064 = vmul.f32 %v1045, 1.442695
    %v1065 = vpow.pop %v1064
    %v1066 = vmul.f32 %v1046, 1.442695
    %v1067 = vpow.pop %v1066
    %v1068 = vmul.f32 %v1047, 1.442695
    %v1069 = vpow.pop %v1068
    %v1070 = vmul.f32 %v1048, 1.442695
    %v1071 = vpow.pop %v1070
    %v1072 = vmul.f32 %v1049, 1.442695
    %v1073 = vpow.pop %v1072
    %v1074 = vmul.f32 %v1050, 1.442695
    %v1075 = vpow.pop %v1074
    %v1076 = vmul.f32 %v1051, 1.442695
    %v1077 = vpow.pop %v1076
    %v1078 = vmul.f32 %v1052, 1.442695
    %v1079 = vpow.pop %v1078
    %v1080 = vmul.f32 %v1053, 1.442695
    %v1081 = vpow.pop %v1080
    %v1082 = vmul.f32 %v1054, 1.442695
    %v1083 = vpow.pop %v1082
    %v1084 = vmul.f32 %v1055, 1.442695
    %v1085 = vpow.pop %v1084
    %v1086 = vmul.f32 %v1056, 1.442695
    %v1087 = vpow.pop %v1086
    %v1088 = vmul.f32 %v1057, 1.442695
    %v1089 = vpow.pop %v1088
    %v1090 = vadd.f32 %v1059, 1.0
    %v1091 = vadd.f32 %v1061, 1.0
    %v1092 = vadd.f32 %v1063, 1.0
    %v1093 = vadd.f32 %v1065, 1.0
    %v1094 = vadd.f32 %v1067, 1.0
    %v1095 = vadd.f32 %v1069, 1.0
    %v1096 = vadd.f32 %v1071, 1.0
    %v1097 = vadd.f32 %v1073, 1.0
    %v1098 = vadd.f32 %v1075, 1.0
    %v1099 = vadd.f32 %v1077, 1.0
    %v1100 = vadd.f32 %v1079, 1.0
    %v1101 = vadd.f32 %v1081, 1.0
    %v1102 = vadd.f32 %v1083, 1.0
    %v1103 = vadd.f32 %v1085, 1.0
    %v1104 = vadd.f32 %v1087, 1.0
    %v1105 = vadd.f32 %v1089, 1.0
    %v1106 = vrcp.pop %v1090
    %v1107 = vmul.f32 %v1090, %v1106
    %v1108 = vsub.f32 1.0, %v1107
    %v1109 = vmul.f32 %v1106, %v1108
    %v1110 = vadd.f32 %v1106, %v1109
    %vm1111 = vweird.f32 %v1090
    %vm1112 = vweird.f32 %v1106
    %vm1113 = vmor %vm1111, %vm1112
    %v1114 = vsel %vm1113, %v1106, %v1110
    %v1115 = vand.u32 2147483647, %v1090
    %vm1116 = vcmp.eq.f32.partialorder %v1115, 8.507059e+37
    %v1117 = vand.u32 %v1090, 2147483648
    %v1118 = vor.u32 1.1754944e-38, %v1117
    %v1119 = vsel %vm1116, %v1118, %v1114
    %v1120 = vmul.f32 1.0, %v1119
    %v1121 = vrcp.pop %v1091
    %v1122 = vmul.f32 %v1091, %v1121
    %v1123 = vsub.f32 1.0, %v1122
    %v1124 = vmul.f32 %v1121, %v1123
    %v1125 = vadd.f32 %v1121, %v1124
    %vm1126 = vweird.f32 %v1091
    %vm1127 = vweird.f32 %v1121
    %vm1128 = vmor %vm1126, %vm1127
    %v1129 = vsel %vm1128, %v1121, %v1125
    %v1130 = vand.u32 2147483647, %v1091
    %vm1131 = vcmp.eq.f32.partialorder %v1130, 8.507059e+37
    %v1132 = vand.u32 %v1091, 2147483648
    %v1133 = vor.u32 1.1754944e-38, %v1132
    %v1134 = vsel %vm1131, %v1133, %v1129
    %v1135 = vmul.f32 1.0, %v1134
    %v1136 = vrcp.pop %v1092
    %v1137 = vmul.f32 %v1092, %v1136
    %v1138 = vsub.f32 1.0, %v1137
    %v1139 = vmul.f32 %v1136, %v1138
    %v1140 = vadd.f32 %v1136, %v1139
    %vm1141 = vweird.f32 %v1092
    %vm1142 = vweird.f32 %v1136
    %vm1143 = vmor %vm1141, %vm1142
    %v1144 = vsel %vm1143, %v1136, %v1140
    %v1145 = vand.u32 2147483647, %v1092
    %vm1146 = vcmp.eq.f32.partialorder %v1145, 8.507059e+37
    %v1147 = vand.u32 %v1092, 2147483648
    %v1148 = vor.u32 1.1754944e-38, %v1147
    %v1149 = vsel %vm1146, %v1148, %v1144
    %v1150 = vmul.f32 1.0, %v1149
    %v1151 = vrcp.pop %v1093
    %v1152 = vmul.f32 %v1093, %v1151
    %v1153 = vsub.f32 1.0, %v1152
    %v1154 = vmul.f32 %v1151, %v1153
    %v1155 = vadd.f32 %v1151, %v1154
    %vm1156 = vweird.f32 %v1093
    %vm1157 = vweird.f32 %v1151
    %vm1158 = vmor %vm1156, %vm1157
    %v1159 = vsel %vm1158, %v1151, %v1155
    %v1160 = vand.u32 2147483647, %v1093
    %vm1161 = vcmp.eq.f32.partialorder %v1160, 8.507059e+37
    %v1162 = vand.u32 %v1093, 2147483648
    %v1163 = vor.u32 1.1754944e-38, %v1162
    %v1164 = vsel %vm1161, %v1163, %v1159
    %v1165 = vmul.f32 1.0, %v1164
    %v1166 = vrcp.pop %v1094
    %v1167 = vmul.f32 %v1094, %v1166
    %v1168 = vsub.f32 1.0, %v1167
    %v1169 = vmul.f32 %v1166, %v1168
    %v1170 = vadd.f32 %v1166, %v1169
    %vm1171 = vweird.f32 %v1094
    %vm1172 = vweird.f32 %v1166
    %vm1173 = vmor %vm1171, %vm1172
    %v1174 = vsel %vm1173, %v1166, %v1170
    %v1175 = vand.u32 2147483647, %v1094
    %vm1176 = vcmp.eq.f32.partialorder %v1175, 8.507059e+37
    %v1177 = vand.u32 %v1094, 2147483648
    %v1178 = vor.u32 1.1754944e-38, %v1177
    %v1179 = vsel %vm1176, %v1178, %v1174
    %v1180 = vmul.f32 1.0, %v1179
    %v1181 = vrcp.pop %v1095
    %v1182 = vmul.f32 %v1095, %v1181
    %v1183 = vsub.f32 1.0, %v1182
    %v1184 = vmul.f32 %v1181, %v1183
    %v1185 = vadd.f32 %v1181, %v1184
    %vm1186 = vweird.f32 %v1095
    %vm1187 = vweird.f32 %v1181
    %vm1188 = vmor %vm1186, %vm1187
    %v1189 = vsel %vm1188, %v1181, %v1185
    %v1190 = vand.u32 2147483647, %v1095
    %vm1191 = vcmp.eq.f32.partialorder %v1190, 8.507059e+37
    %v1192 = vand.u32 %v1095, 2147483648
    %v1193 = vor.u32 1.1754944e-38, %v1192
    %v1194 = vsel %vm1191, %v1193, %v1189
    %v1195 = vmul.f32 1.0, %v1194
    %v1196 = vrcp.pop %v1096
    %v1197 = vmul.f32 %v1096, %v1196
    %v1198 = vsub.f32 1.0, %v1197
    %v1199 = vmul.f32 %v1196, %v1198
    %v1200 = vadd.f32 %v1196, %v1199
    %vm1201 = vweird.f32 %v1096
    %vm1202 = vweird.f32 %v1196
    %vm1203 = vmor %vm1201, %vm1202
    %v1204 = vsel %vm1203, %v1196, %v1200
    %v1205 = vand.u32 2147483647, %v1096
    %vm1206 = vcmp.eq.f32.partialorder %v1205, 8.507059e+37
    %v1207 = vand.u32 %v1096, 2147483648
    %v1208 = vor.u32 1.1754944e-38, %v1207
    %v1209 = vsel %vm1206, %v1208, %v1204
    %v1210 = vmul.f32 1.0, %v1209
    %v1211 = vrcp.pop %v1097
    %v1212 = vmul.f32 %v1097, %v1211
    %v1213 = vsub.f32 1.0, %v1212
    %v1214 = vmul.f32 %v1211, %v1213
    %v1215 = vadd.f32 %v1211, %v1214
    %vm1216 = vweird.f32 %v1097
    %vm1217 = vweird.f32 %v1211
    %vm1218 = vmor %vm1216, %vm1217
    %v1219 = vsel %vm1218, %v1211, %v1215
    %v1220 = vand.u32 2147483647, %v1097
    %vm1221 = vcmp.eq.f32.partialorder %v1220, 8.507059e+37
    %v1222 = vand.u32 %v1097, 2147483648
    %v1223 = vor.u32 1.1754944e-38, %v1222
    %v1224 = vsel %vm1221, %v1223, %v1219
    %v1225 = vmul.f32 1.0, %v1224
    %v1226 = vrcp.pop %v1098
    %v1227 = vmul.f32 %v1098, %v1226
    %v1228 = vsub.f32 1.0, %v1227
    %v1229 = vmul.f32 %v1226, %v1228
    %v1230 = vadd.f32 %v1226, %v1229
    %vm1231 = vweird.f32 %v1098
    %vm1232 = vweird.f32 %v1226
    %vm1233 = vmor %vm1231, %vm1232
    %v1234 = vsel %vm1233, %v1226, %v1230
    %v1235 = vand.u32 2147483647, %v1098
    %vm1236 = vcmp.eq.f32.partialorder %v1235, 8.507059e+37
    %v1237 = vand.u32 %v1098, 2147483648
    %v1238 = vor.u32 1.1754944e-38, %v1237
    %v1239 = vsel %vm1236, %v1238, %v1234
    %v1240 = vmul.f32 1.0, %v1239
    %v1241 = vrcp.pop %v1099
    %v1242 = vmul.f32 %v1099, %v1241
    %v1243 = vsub.f32 1.0, %v1242
    %v1244 = vmul.f32 %v1241, %v1243
    %v1245 = vadd.f32 %v1241, %v1244
    %vm1246 = vweird.f32 %v1099
    %vm1247 = vweird.f32 %v1241
    %vm1248 = vmor %vm1246, %vm1247
    %v1249 = vsel %vm1248, %v1241, %v1245
    %v1250 = vand.u32 2147483647, %v1099
    %vm1251 = vcmp.eq.f32.partialorder %v1250, 8.507059e+37
    %v1252 = vand.u32 %v1099, 2147483648
    %v1253 = vor.u32 1.1754944e-38, %v1252
    %v1254 = vsel %vm1251, %v1253, %v1249
    %v1255 = vmul.f32 1.0, %v1254
    %v1256 = vrcp.pop %v1100
    %v1257 = vmul.f32 %v1100, %v1256
    %v1258 = vsub.f32 1.0, %v1257
    %v1259 = vmul.f32 %v1256, %v1258
    %v1260 = vadd.f32 %v1256, %v1259
    %vm1261 = vweird.f32 %v1100
    %vm1262 = vweird.f32 %v1256
    %vm1263 = vmor %vm1261, %vm1262
    %v1264 = vsel %vm1263, %v1256, %v1260
    %v1265 = vand.u32 2147483647, %v1100
    %vm1266 = vcmp.eq.f32.partialorder %v1265, 8.507059e+37
    %v1267 = vand.u32 %v1100, 2147483648
    %v1268 = vor.u32 1.1754944e-38, %v1267
    %v1269 = vsel %vm1266, %v1268, %v1264
    %v1270 = vmul.f32 1.0, %v1269
    %v1271 = vrcp.pop %v1101
    %v1272 = vmul.f32 %v1101, %v1271
    %v1273 = vsub.f32 1.0, %v1272
    %v1274 = vmul.f32 %v1271, %v1273
    %v1275 = vadd.f32 %v1271, %v1274
    %vm1276 = vweird.f32 %v1101
    %vm1277 = vweird.f32 %v1271
    %vm1278 = vmor %vm1276, %vm1277
    %v1279 = vsel %vm1278, %v1271, %v1275
    %v1280 = vand.u32 2147483647, %v1101
    %vm1281 = vcmp.eq.f32.partialorder %v1280, 8.507059e+37
    %v1282 = vand.u32 %v1101, 2147483648
    %v1283 = vor.u32 1.1754944e-38, %v1282
    %v1284 = vsel %vm1281, %v1283, %v1279
    %v1285 = vmul.f32 1.0, %v1284
    %v1286 = vrcp.pop %v1102
    %v1287 = vmul.f32 %v1102, %v1286
    %v1288 = vsub.f32 1.0, %v1287
    %v1289 = vmul.f32 %v1286, %v1288
    %v1290 = vadd.f32 %v1286, %v1289
    %vm1291 = vweird.f32 %v1102
    %vm1292 = vweird.f32 %v1286
    %vm1293 = vmor %vm1291, %vm1292
    %v1294 = vsel %vm1293, %v1286, %v1290
    %v1295 = vand.u32 2147483647, %v1102
    %vm1296 = vcmp.eq.f32.partialorder %v1295, 8.507059e+37
    %v1297 = vand.u32 %v1102, 2147483648
    %v1298 = vor.u32 1.1754944e-38, %v1297
    %v1299 = vsel %vm1296, %v1298, %v1294
    %v1300 = vmul.f32 1.0, %v1299
    %v1301 = vrcp.pop %v1103
    %v1302 = vmul.f32 %v1103, %v1301
    %v1303 = vsub.f32 1.0, %v1302
    %v1304 = vmul.f32 %v1301, %v1303
    %v1305 = vadd.f32 %v1301, %v1304
    %vm1306 = vweird.f32 %v1103
    %vm1307 = vweird.f32 %v1301
    %vm1308 = vmor %vm1306, %vm1307
    %v1309 = vsel %vm1308, %v1301, %v1305
    %v1310 = vand.u32 2147483647, %v1103
    %vm1311 = vcmp.eq.f32.partialorder %v1310, 8.507059e+37
    %v1312 = vand.u32 %v1103, 2147483648
    %v1313 = vor.u32 1.1754944e-38, %v1312
    %v1314 = vsel %vm1311, %v1313, %v1309
    %v1315 = vmul.f32 1.0, %v1314
    %v1316 = vrcp.pop %v1104
    %v1317 = vmul.f32 %v1104, %v1316
    %v1318 = vsub.f32 1.0, %v1317
    %v1319 = vmul.f32 %v1316, %v1318
    %v1320 = vadd.f32 %v1316, %v1319
    %vm1321 = vweird.f32 %v1104
    %vm1322 = vweird.f32 %v1316
    %vm1323 = vmor %vm1321, %vm1322
    %v1324 = vsel %vm1323, %v1316, %v1320
    %v1325 = vand.u32 2147483647, %v1104
    %vm1326 = vcmp.eq.f32.partialorder %v1325, 8.507059e+37
    %v1327 = vand.u32 %v1104, 2147483648
    %v1328 = vor.u32 1.1754944e-38, %v1327
    %v1329 = vsel %vm1326, %v1328, %v1324
    %v1330 = vmul.f32 1.0, %v1329
    %v1331 = vrcp.pop %v1105
    %v1332 = vmul.f32 %v1105, %v1331
    %v1333 = vsub.f32 1.0, %v1332
    %v1334 = vmul.f32 %v1331, %v1333
    %v1335 = vadd.f32 %v1331, %v1334
    %vm1336 = vweird.f32 %v1105
    %vm1337 = vweird.f32 %v1331
    %vm1338 = vmor %vm1336, %vm1337
    %v1339 = vsel %vm1338, %v1331, %v1335
    %v1340 = vand.u32 2147483647, %v1105
    %vm1341 = vcmp.eq.f32.partialorder %v1340, 8.507059e+37
    %v1342 = vand.u32 %v1105, 2147483648
    %v1343 = vor.u32 1.1754944e-38, %v1342
    %v1344 = vsel %vm1341, %v1343, %v1339
    %v1345 = vmul.f32 1.0, %v1344
    %v1346 = vmul.f32 %v1120, %v882
    %v1347 = vmul.f32 %v1135, %v884
    %v1348 = vmul.f32 %v1150, %v887
    %v1349 = vmul.f32 %v1165, %v889
    %v1350 = vmul.f32 %v1180, %v892
    %v1351 = vmul.f32 %v1195, %v894
    %v1352 = vmul.f32 %v1210, %v897
    %v1353 = vmul.f32 %v1225, %v899
    %v1354 = vmul.f32 %v1240, %v902
    %v1355 = vmul.f32 %v1255, %v904
    %v1356 = vmul.f32 %v1270, %v907
    %v1357 = vmul.f32 %v1285, %v909
    %v1358 = vmul.f32 %v1300, %v912
    %v1359 = vmul.f32 %v1315, %v914
    %v1360 = vmul.f32 %v1330, %v917
    %v1361 = vmul.f32 %v1345, %v919
    %1362 = vst [vmem:[#allocation2] sm:$0xff] %v1346
    %1363 = vst [vmem:[#allocation2 + $0x8] sm:$0xff] %v1347
    %1364 = vst [vmem:[#allocation2 + $0x10] sm:$0xff] %v1348
    %1365 = vst [vmem:[#allocation2 + $0x18] sm:$0xff] %v1349
    %1366 = vst [vmem:[#allocation2 + $0x20] sm:$0xff] %v1350
    %1367 = vst [vmem:[#allocation2 + $0x28] sm:$0xff] %v1351
    %1368 = vst [vmem:[#allocation2 + $0x30] sm:$0xff] %v1352
    %1369 = vst [vmem:[#allocation2 + $0x38] sm:$0xff] %v1353
    %1370 = vst [vmem:[#allocation2 + $0x40] sm:$0xff] %v1354
    %1371 = vst [vmem:[#allocation2 + $0x48] sm:$0xff] %v1355
    %1372 = vst [vmem:[#allocation2 + $0x50] sm:$0xff] %v1356
    %1373 = vst [vmem:[#allocation2 + $0x58] sm:$0xff] %v1357
    %1374 = vst [vmem:[#allocation2 + $0x60] sm:$0xff] %v1358
    %1375 = vst [vmem:[#allocation2 + $0x68] sm:$0xff] %v1359
    %1376 = vst [vmem:[#allocation2 + $0x70] sm:$0xff] %v1360
    %1377 = vst [vmem:[#allocation2 + $0x78] sm:$0xff] %v1361
    // Predicated region
    $region30: #{vrwkv_channel_mix_forward.1} parent=1 // pred_check
      _
    $region31: #{vrwkv_channel_mix_forward.1} parent=1 // pred_check_branch
      %1379 = sbr.rel (0) target = $region33
    $region32: #{vrwkv_channel_mix_forward.1} parent=1 // pred_region
      %1381 = vsyncadd [#allocation3], 0
      %s1382 = sshll.u32 [#allocation2], 4
      %s1383 = int_to_ptr.vmem [resolvable:$true] %s1382
      %s1384 = sshll.u32 %s7, 4
      %s1385 = int_to_ptr.hbm [resolvable:$true] %s1384
      %1390 = dma.vmem_to_hbm [thread:$0]  %s1383, 2048, %s1385, [#allocation3], 128, 128, 8
    $region33: #{vrwkv_channel_mix_forward.1} parent=1 // pred_fallthru
      _
    // Predicated region
    $region34: #{vrwkv_channel_mix_forward.1} parent=1 // pred_check
      _
    $region35: #{vrwkv_channel_mix_forward.1} parent=1 // pred_check_branch
      %1392 = sbr.rel (0) target = $region37
    $region36: #{vrwkv_channel_mix_forward.1} parent=1 // pred_region
      %1394 = dma.done [#allocation3], 2048
    $region37: #{vrwkv_channel_mix_forward.1} parent=1 // pred_fallthru
      _
    %1395 = vsyncpa [#allocation3], 1

</llo_original>
